<compile_context>
chip_gen: v6e
topology: v6e:2x2x1
jax: 0.10.0
libtpu: 0.0.40
codegen_flags: <defaults>
</compile_context>

<pallas_src>
import jax
import jax.numpy as jnp
from jax.experimental import pallas as pl
from jax.experimental.pallas import tpu as pltpu


def _sigmoid_eup(y):
    # sigmoid(y) == 0.5 * tanh(0.5 * y) + 0.5  — tanh goes to the EUP slot.
    return 0.5 * jnp.tanh(0.5 * y) + 0.5


def _conv1x1_sigmoid_hwlane_kernel(x_ref, w_ref, b_ref, o_ref):
    # x_ref: (Cin, t_hw), w_ref: (Cout, Cin), b_ref: (Cout, 1), o_ref: (Cout, t_hw)
    y = jnp.dot(w_ref[...], x_ref[...], preferred_element_type=jnp.float32)
    y = y + b_ref[...]                      # bias broadcast along lane (HW) axis
    o_ref[...] = _sigmoid_eup(y).astype(o_ref.dtype)


def _conv1x1_sigmoid_coutlane_kernel(x_ref, w_ref, b_ref, o_ref):
    # x_ref: (t_m, Cin), w_ref: (Cin, Cout), b_ref: (1, Cout), o_ref: (t_m, Cout)
    y = jnp.dot(x_ref[...], w_ref[...], preferred_element_type=jnp.float32)
    y = y + b_ref[...]                      # bias broadcast along lane (Cout) axis
    o_ref[...] = _sigmoid_eup(y).astype(o_ref.dtype)


def _pick_hw_tile(hw, n, max_tile=1024):
    """Largest tile; never fall back to tiny tiles. Split once for 2 TCs."""
    t = hw if hw <= max_tile else max_tile      # partial last block is masked
    # If the grid would be a single point (v7x second TensorCore idle) and the
    # spatial extent is big enough to be worth splitting, cut HW in two.
    if n * pl.cdiv(hw, t) < 2 and hw >= 256:
        t = ((pl.cdiv(hw, 2) + 127) // 128) * 128   # 128-multiple tile
    return t


def conv1x1_sigmoid(x_nchw, weight, bias):
    """x_nchw: (N, Cin, H, W); weight: (Cout, Cin, 1, 1); bias: (Cout,)."""
    N, Cin, H, W = x_nchw.shape
    Cout = weight.shape[0]
    HW = H * W
    w_mat = weight.reshape(Cout, Cin)

    dsz = jnp.dtype(x_nchw.dtype).itemsize
    cost = pl.CostEstimate(
        flops=2 * N * HW * Cin * Cout,
        transcendentals=N * HW * Cout,
        bytes_accessed=(N * Cin * HW + Cout * Cin + Cout + N * Cout * HW) * dsz,
    )

    if HW < 128:
        # ---- Small-HW path: Cout on lanes (lane-dense output stores). ----
        M = N * HW
        # For HW == 1 this is a free reshape; for small HW > 1 the transpose
        # touches a negligible amount of data.
        x_rows = jnp.transpose(x_nchw.reshape(N, Cin, HW), (0, 2, 1)).reshape(M, Cin)
        w_t = w_mat.T                        # (Cin, Cout)
        b_row = bias.reshape(1, Cout)

        t_m = M if M <= 512 else 256         # 256 is a sublane multiple
        n_m = pl.cdiv(M, t_m)

        out = pl.pallas_call(
            _conv1x1_sigmoid_coutlane_kernel,
            out_shape=jax.ShapeDtypeStruct((M, Cout), x_nchw.dtype),
            grid_spec=pltpu.PrefetchScalarGridSpec(
                num_scalar_prefetch=0,
                grid=(n_m,),
                in_specs=[
                    pl.BlockSpec((t_m, Cin), lambda i: (i, 0)),
                    pl.BlockSpec((Cin, Cout), lambda i: (0, 0)),
                    pl.BlockSpec((1, Cout), lambda i: (0, 0)),
                ],
                out_specs=pl.BlockSpec((t_m, Cout), lambda i: (i, 0)),
            ),
            compiler_params=pltpu.CompilerParams(
                dimension_semantics=("parallel",),
            ),
            cost_estimate=cost,
        )(x_rows, w_t, b_row)
        return out.reshape(N, HW, Cout).transpose(0, 2, 1).reshape(N, Cout, H, W)

    # ---- Large-HW path: NCHW-native, HW on lanes, no transposes. ----
    x_rows = x_nchw.reshape(N, Cin, HW)      # free reshape
    b_col = bias.reshape(Cout, 1)

    t_hw = _pick_hw_tile(HW, N)
    n_hw = pl.cdiv(HW, t_hw)

    out_rows = pl.pallas_call(
        _conv1x1_sigmoid_hwlane_kernel,
        out_shape=jax.ShapeDtypeStruct((N, Cout, HW), x_nchw.dtype),
        grid_spec=pltpu.PrefetchScalarGridSpec(
            num_scalar_prefetch=0,
            grid=(N, n_hw),
            in_specs=[
                # Batch dim squeezed out of the kernel view; tile HW.
                pl.BlockSpec((None, Cin, t_hw), lambda n, j: (n, 0, j)),
                # Weight / bias: small, untiled, resident across the grid.
                pl.BlockSpec((Cout, Cin), lambda n, j: (0, 0)),
                pl.BlockSpec((Cout, 1), lambda n, j: (0, 0)),
            ],
            out_specs=pl.BlockSpec((None, Cout, t_hw), lambda n, j: (n, 0, j)),
        ),
        compiler_params=pltpu.CompilerParams(
            dimension_semantics=("parallel", "parallel"),
        ),
        cost_estimate=cost,
    )(x_rows, w_mat, b_col)

    return out_rows.reshape(N, Cout, H, W)


def _reference(x_nchw, weight, bias):
    Cout, Cin = weight.shape[0], weight.shape[1]
    return jax.nn.sigmoid(
        jnp.einsum("nchw,oc->nohw", x_nchw, weight.reshape(Cout, Cin))
        + bias.reshape(1, Cout, 1, 1)
    )


if __name__ == "__main__":
    key = jax.random.PRNGKey(0)
    kx, kw, kb = jax.random.split(key, 3)

    N, Cin, Cout, H, W = 1, 28, 672, 1, 1

    # Deterministic synthetic input + params (PyTorch Conv2d default init scale).
    x190 = jax.random.normal(kx, (N, Cin, H, W), dtype=jnp.float32)
    bound = 1.0 / (float(Cin) ** 0.5)
    weight = jax.random.uniform(kw, (Cout, Cin, 1, 1), dtype=jnp.float32,
                                minval=-bound, maxval=bound)
    bias = jax.random.uniform(kb, (Cout,), dtype=jnp.float32,
                              minval=-bound, maxval=bound)

    # 1) Module's literal shape (1, 28, 1, 1) — small-HW (Cout-on-lanes) path.
    out = jax.block_until_ready(conv1x1_sigmoid(x190, weight, bias))
    assert out.shape == (N, Cout, H, W)
    assert jnp.allclose(out, _reference(x190, weight, bias), atol=1e-5, rtol=1e-5)

    # 2) Small-HW path with HW > 1 and batching.
    x_sm = jax.random.normal(kx, (2, Cin, 4, 4), dtype=jnp.float32)
    out_sm = jax.block_until_ready(conv1x1_sigmoid(x_sm, weight, bias))
    assert jnp.allclose(out_sm, _reference(x_sm, weight, bias),
                        atol=1e-5, rtol=1e-5)

    # 3) Large-HW path, batched, single HW block per sample.
    x_mid = jax.random.normal(kx, (2, Cin, 16, 16), dtype=jnp.float32)
    out_mid = jax.block_until_ready(conv1x1_sigmoid(x_mid, weight, bias))
    assert jnp.allclose(out_mid, _reference(x_mid, weight, bias),
                        atol=1e-5, rtol=1e-5)

    # 4) Large-HW path, N=1 with the two-TensorCore split (HW=512 -> 2 tiles).
    x_split = jax.random.normal(kx, (1, Cin, 16, 32), dtype=jnp.float32)
    out_split = jax.block_until_ready(conv1x1_sigmoid(x_split, weight, bias))
    assert jnp.allclose(out_split, _reference(x_split, weight, bias),
                        atol=1e-5, rtol=1e-5)

    # 5) Large-HW path with a masked partial last block (HW = 1152 -> 1024+128).
    x_rag = jax.random.normal(kx, (1, Cin, 36, 32), dtype=jnp.float32)
    out_rag = jax.block_until_ready(conv1x1_sigmoid(x_rag, weight, bias))
    assert jnp.allclose(out_rag, _reference(x_rag, weight, bias),
                        atol=1e-5, rtol=1e-5)

    print("KERNEL_OK")
</pallas_src>

<mosaic_0001>
module attributes {stable_mosaic.version = 11 : i64} {
  func.func @_conv1x1_sigmoid_coutlane_kernel(%arg0: i32, %arg1: memref<1x28xf32, #tpu.memory_space<vmem>>, %arg2: memref<28x672xf32, #tpu.memory_space<vmem>>, %arg3: memref<1x672xf32, #tpu.memory_space<vmem>>, %arg4: memref<1x672xf32, #tpu.memory_space<vmem>>) attributes {dimension_semantics = [#tpu.dimension_semantics<parallel>], iteration_bounds = array<i64: 1>, scalar_prefetch = 0 : i64, scratch_operands = 0 : i64, tpu.core_type = #tpu.core_type<tc>, window_params = [{transform_indices = @transform_0, window_bounds = array<i64: 1, 28>}, {pipeline_mode = #tpu.pipeline_mode<synchronous>, transform_indices = @transform_1, window_bounds = array<i64: 28, 672>}, {pipeline_mode = #tpu.pipeline_mode<synchronous>, transform_indices = @transform_2, window_bounds = array<i64: 1, 672>}, {transform_indices = @transform_3, window_bounds = array<i64: 1, 672>}]} {
    %c0 = arith.constant 0 : index
    %c0_0 = arith.constant 0 : index
    %0 = vector.load %arg1[%c0, %c0_0] : memref<1x28xf32, #tpu.memory_space<vmem>>, vector<1x28xf32>
    %c0_1 = arith.constant 0 : index
    %c0_2 = arith.constant 0 : index
    %1 = vector.load %arg2[%c0_1, %c0_2] : memref<28x672xf32, #tpu.memory_space<vmem>>, vector<28x672xf32>
    %cst = arith.constant dense<0.000000e+00> : vector<1x672xf32>
    %2 = tpu.matmul %0, %1, %cst {dimension_numbers = #tpu.dot_dimension_numbers<[1], [0], [0], [1], [0, 0, 1, 1], [], []>} : vector<1x28xf32>, vector<28x672xf32>, vector<1x672xf32> -> vector<1x672xf32>
    %c0_3 = arith.constant 0 : index
    %c0_4 = arith.constant 0 : index
    %3 = vector.load %arg3[%c0_3, %c0_4] : memref<1x672xf32, #tpu.memory_space<vmem>>, vector<1x672xf32>
    %4 = arith.addf %2, %3 : vector<1x672xf32>
    %cst_5 = arith.constant 5.000000e-01 : f32
    %5 = vector.broadcast %cst_5 : f32 to vector<1x672xf32>
    %6 = arith.mulf %5, %4 : vector<1x672xf32>
    %7 = math.tanh %6 : vector<1x672xf32>
    %cst_6 = arith.constant 5.000000e-01 : f32
    %8 = vector.broadcast %cst_6 : f32 to vector<1x672xf32>
    %9 = arith.mulf %8, %7 : vector<1x672xf32>
    %cst_7 = arith.constant 5.000000e-01 : f32
    %10 = vector.broadcast %cst_7 : f32 to vector<1x672xf32>
    %11 = arith.addf %9, %10 : vector<1x672xf32>
    %c0_8 = arith.constant 0 : index
    %c0_9 = arith.constant 0 : index
    %12 = vector.load %arg4[%c0_8, %c0_9] : memref<1x672xf32, #tpu.memory_space<vmem>>, vector<1x672xf32>
    tpu.vector_store %arg4[%c0_8, %c0_9], %11 {strides = array<i32>} : memref<1x672xf32, #tpu.memory_space<vmem>>, vector<1x672xf32>,
    return
  }
  func.func @transform_0(%arg0: i32) -> (i32, i32) {
    %c0_i32 = arith.constant 0 : i32
    %c0_i32_0 = arith.constant 0 : i32
    return %arg0, %c0_i32 : i32, i32
  }
  func.func @transform_1(%arg0: i32) -> (i32, i32) {
    %c0_i32 = arith.constant 0 : i32
    %c0_i32_0 = arith.constant 0 : i32
    %c0_i32_1 = arith.constant 0 : i32
    return %c0_i32, %c0_i32_0 : i32, i32
  }
  func.func @transform_2(%arg0: i32) -> (i32, i32) {
    %c0_i32 = arith.constant 0 : i32
    %c0_i32_0 = arith.constant 0 : i32
    %c0_i32_1 = arith.constant 0 : i32
    return %c0_i32, %c0_i32_0 : i32, i32
  }
  func.func @transform_3(%arg0: i32) -> (i32, i32) {
    %c0_i32 = arith.constant 0 : i32
    %c0_i32_0 = arith.constant 0 : i32
    return %arg0, %c0_i32 : i32, i32
  }
}

</mosaic_0001>

<llo_original>
// kernel: tpu_custom_call.1
$region0: #{tpu_custom_call.1}
  #allocation0 [shape = 'u32[]', space=smem, size = 0x4, offset = 0x4, fixed_abs, tag = 'smem constant byte address 0x4 - core index']
  #allocation1 [shape = 'u32[144,128]{1,0:T(1,128)}', space=vmem, size = 0x12000, scoped, tag = 'internal scratch']
  %s0 = inlined_call_operand.hbm [shape: f32[1,28], index: 0, kind: input, shape index: {}]
  %s1 = inlined_call_operand.hbm [shape: f32[28,672], index: 1, kind: input, shape index: {}]
  %s2 = inlined_call_operand.hbm [shape: f32[1,672], index: 2, kind: input, shape index: {}]
  %s3 = inlined_call_operand.hbm [shape: f32[1,672], index: 3, kind: output, shape index: {}]
  %s4 = sld [smem:[#allocation0]]
  $region34: #{tpu_custom_call.1} parent=0
    _
  %s6 = ssub.s32 1, %s4
  %s7 = scalar_select 0, %s6, %s4
  $region1: #{tpu_custom_call.1} parent=0
    #allocation2 [shape = 'u8[512]{0}', space=vmem, size = 0x400, scoped, tag = 'input window, operand 0, single buffered']
    #allocation3 [shape = 's32[1]{0}', space=sflag, size = 0x4, scoped, tag = 'scoped memory for tpu_custom_call.1']
    #allocation4 [shape = 's32[1]{0}', space=sflag, size = 0x4, scoped, tag = 'scoped memory for tpu_custom_call.1']
    #allocation5 [shape = 'u8[98304]{0}', space=vmem, size = 0x18000, scoped, tag = 'input window, operand 1, single buffered']
    #allocation6 [shape = 's32[1]{0}', space=sflag, size = 0x4, scoped, tag = 'scoped memory for tpu_custom_call.1']
    #allocation7 [shape = 'u8[3072]{0}', space=vmem, size = 0xc00, scoped, tag = 'input window, operand 2, single buffered']
    #allocation8 [shape = 'u8[3072]{0}', space=vmem, size = 0xc00, scoped, tag = 'output window, operand 0, single buffered']
    %8 = vsyncpa [#allocation3], 0
    %9 = vsyncpa [#allocation6], 0
    %10 = vsyncpa [#allocation4], 0
    // Predicated region
    $region2: #{tpu_custom_call.1} parent=1 // pred_check
      _
    $region3: #{tpu_custom_call.1} parent=1 // pred_check_branch
      %12 = sbr.rel (0) target = $region5
    $region4: #{tpu_custom_call.1} parent=1 // pred_region
      %s14 = ssub.s32 16, 16
      %15 = vsyncadd [#allocation3], %s14
      %s17 = sshll.u32 [#allocation2], 4
      %s18 = int_to_ptr.vmem [resolvable:$true] %s17
      %20 = dma.hbm_to_vmem [thread:$0]  %s0, 16, %s18, [#allocation3]
    $region5: #{tpu_custom_call.1} parent=1 // pred_fallthru
      _
    // Predicated region
    $region6: #{tpu_custom_call.1} parent=1 // pred_check
      _
    $region7: #{tpu_custom_call.1} parent=1 // pred_check_branch
      %22 = sbr.rel (0) target = $region9
    $region8: #{tpu_custom_call.1} parent=1 // pred_region
      %s24 = ssub.s32 3072, 3072
      %25 = vsyncadd [#allocation6], %s24
      %s26 = sshll.u32 [#allocation5], 4
      %s27 = int_to_ptr.vmem [resolvable:$true] %s26
      %32 = dma.hbm_to_vmem [thread:$0]  %s1, 3072, %s27, [#allocation6], 768, 768, 48
    $region9: #{tpu_custom_call.1} parent=1 // pred_fallthru
      _
    // Predicated region
    $region10: #{tpu_custom_call.1} parent=1 // pred_check
      _
    $region11: #{tpu_custom_call.1} parent=1 // pred_check_branch
      %34 = sbr.rel (0) target = $region13
    $region12: #{tpu_custom_call.1} parent=1 // pred_region
      %s36 = ssub.s32 96, 96
      %37 = vsyncadd [#allocation6], %s36
      %s39 = sshll.u32 [#allocation7], 4
      %s40 = int_to_ptr.vmem [resolvable:$true] %s39
      %42 = dma.hbm_to_vmem [thread:$0]  %s2, 96, %s40, [#allocation6]
    $region13: #{tpu_custom_call.1} parent=1 // pred_fallthru
      _
    // Predicated region
    $region14: #{tpu_custom_call.1} parent=1 // pred_check
      _
    $region15: #{tpu_custom_call.1} parent=1 // pred_check_branch
      %44 = sbr.rel (0) target = $region17
    $region16: #{tpu_custom_call.1} parent=1 // pred_region
      %45 = dma.done [#allocation3], 16
    $region17: #{tpu_custom_call.1} parent=1 // pred_fallthru
      _
    // Predicated region
    $region18: #{tpu_custom_call.1} parent=1 // pred_check
      _
    $region19: #{tpu_custom_call.1} parent=1 // pred_check_branch
      %47 = sbr.rel (0) target = $region21
    $region20: #{tpu_custom_call.1} parent=1 // pred_region
      %48 = dma.done [#allocation6], 3072
    $region21: #{tpu_custom_call.1} parent=1 // pred_fallthru
      _
    // Predicated region
    $region22: #{tpu_custom_call.1} parent=1 // pred_check
      _
    $region23: #{tpu_custom_call.1} parent=1 // pred_check_branch
      %50 = sbr.rel (0) target = $region25
    $region24: #{tpu_custom_call.1} parent=1 // pred_region
      %51 = dma.done [#allocation6], 96
    $region25: #{tpu_custom_call.1} parent=1 // pred_fallthru
      _
    %v52 = vld [vmem:[#allocation2] sm:$0x1]
    %v53 = vld [vmem:[#allocation5] sm:$0xff]
    %v54 = vld [vmem:[#allocation5 + $0x8] sm:$0xff]
    %v55 = vld [vmem:[#allocation5 + $0x10] sm:$0xff]
    %v56 = vld [vmem:[#allocation5 + $0x18] sm:$0xff]
    %v57 = vld [vmem:[#allocation5 + $0x20] sm:$0xff]
    %v58 = vld [vmem:[#allocation5 + $0x28] sm:$0xff]
    %v59 = vld [vmem:[#allocation5 + $0x30] sm:$0xff]
    %v60 = vld [vmem:[#allocation5 + $0x38] sm:$0xff]
    %v61 = vld [vmem:[#allocation5 + $0x40] sm:$0xff]
    %v62 = vld [vmem:[#allocation5 + $0x48] sm:$0xff]
    %v63 = vld [vmem:[#allocation5 + $0x50] sm:$0xff]
    %v64 = vld [vmem:[#allocation5 + $0x58] sm:$0xff]
    %v65 = vld [vmem:[#allocation5 + $0x60] sm:$0xff]
    %v66 = vld [vmem:[#allocation5 + $0x68] sm:$0xff]
    %v67 = vld [vmem:[#allocation5 + $0x70] sm:$0xff]
    %v68 = vld [vmem:[#allocation5 + $0x78] sm:$0xff]
    %v69 = vld [vmem:[#allocation5 + $0x80] sm:$0xff]
    %v70 = vld [vmem:[#allocation5 + $0x88] sm:$0xff]
    %v71 = vld [vmem:[#allocation5 + $0x90] sm:$0xf]
    %v72 = vld [vmem:[#allocation5 + $0x98] sm:$0xf]
    %v73 = vld [vmem:[#allocation5 + $0xa0] sm:$0xf]
    %v74 = vld [vmem:[#allocation5 + $0xa8] sm:$0xf]
    %v75 = vld [vmem:[#allocation5 + $0xb0] sm:$0xf]
    %v76 = vld [vmem:[#allocation5 + $0xb8] sm:$0xf]
    %v77 = vld [vmem:[#allocation7] sm:$0x3f]
    %v79 = vlaneseq
    %v80 = vshrl.u32 %v79, 7
    %v81 = vsub.s32 0, %v80
    %v82 = vrot.slane %v77, %v81
    %v83 = vlaneseq
    %v84 = vshrl.u32 %v83, 7
    %v85 = vsub.s32 1, %v84
    %v86 = vrot.slane %v77, %v85
    %v87 = vlaneseq
    %v88 = vshrl.u32 %v87, 7
    %v89 = vsub.s32 2, %v88
    %v90 = vrot.slane %v77, %v89
    %v91 = vlaneseq
    %v92 = vshrl.u32 %v91, 7
    %v93 = vsub.s32 3, %v92
    %v94 = vrot.slane %v77, %v93
    %v95 = vlaneseq
    %v96 = vshrl.u32 %v95, 7
    %v97 = vsub.s32 4, %v96
    %v98 = vrot.slane %v77, %v97
    %v99 = vlaneseq
    %v100 = vshrl.u32 %v99, 7
    %v101 = vsub.s32 5, %v100
    %v102 = vrot.slane %v77, %v101
    %vm109 = vcmask 228352
    %v111 = vsel %vm109, %v52, 0
    %vm113 = vcmask 1043456
    %v115 = vsel %vm113, %v71, 0
    %v118 = vsel %vm113, %v72, 0
    %v121 = vsel %vm113, %v73, 0
    %v124 = vsel %vm113, %v74, 0
    %v127 = vsel %vm113, %v75, 0
    %v130 = vsel %vm113, %v76, 0
    %132 = vmatprep.subr.mxu0 0.0
    %133 = vmatpush1.msra.mxu0 0.0
    %134 = vmatprep.subr.mxu0 0.0
    %135 = vmatpush1.msra.mxu0 0.0
    %136 = vmatprep.subr.mxu0 0.0
    %137 = vmatpush1.msra.mxu0 0.0
    %138 = vmatprep.subr.mxu0 0.0
    %139 = vmatpush1.msra.mxu0 0.0
    %140 = vmatprep.subr.mxu0 0.0
    %141 = vmatpush1.msra.mxu0 0.0
    %142 = vmatprep.subr.mxu0 0.0
    %143 = vmatpush1.msra.mxu0 0.0
    %144 = vmatprep.subr.mxu0 0.0
    %145 = vmatpush1.msra.mxu0 0.0
    %146 = vmatprep.subr.mxu0 0.0
    %147 = vmatpush1.msra.mxu0 0.0
    %148 = vmatprep.subr.mxu0 0.0
    %149 = vmatpush1.msra.mxu0 0.0
    %150 = vmatprep.subr.mxu0 0.0
    %151 = vmatpush1.msra.mxu0 0.0
    %152 = vmatprep.subr.mxu0 0.0
    %153 = vmatpush1.msra.mxu0 0.0
    %154 = vmatprep.subr.mxu0 0.0
    %155 = vmatpush1.msra.mxu0 0.0
    %156 = vmatprep.subr.mxu0 %v118
    %157 = vmatpush1.msra.mxu0 %v115
    %158 = vmatprep.subr.mxu0 %v66
    %159 = vmatpush1.msra.mxu0 %v65
    %160 = vmatprep.subr.mxu0 %v60
    %161 = vmatpush1.msra.mxu0 %v59
    %162 = vmatprep.subr.mxu0 %v54
    %163 = vmatpush1.msra.mxu0 %v53
    %164 = vmatprep.subr.mxu0 0.0
    %165 = vmatpush2.msra.mxu0 0.0
    %166 = vmatprep.subr.mxu0 0.0
    %167 = vmatpush2.msra.mxu0 0.0
    %168 = vmatprep.subr.mxu0 0.0
    %169 = vmatpush2.msra.mxu0 0.0
    %170 = vmatprep.subr.mxu0 0.0
    %171 = vmatpush2.msra.mxu0 0.0
    %172 = vmatprep.subr.mxu0 0.0
    %173 = vmatpush2.msra.mxu0 0.0
    %174 = vmatprep.subr.mxu0 0.0
    %175 = vmatpush2.msra.mxu0 0.0
    %176 = vmatprep.subr.mxu0 0.0
    %177 = vmatpush2.msra.mxu0 0.0
    %178 = vmatprep.subr.mxu0 0.0
    %179 = vmatpush2.msra.mxu0 0.0
    %180 = vmatprep.subr.mxu0 0.0
    %181 = vmatpush2.msra.mxu0 0.0
    %182 = vmatprep.subr.mxu0 0.0
    %183 = vmatpush2.msra.mxu0 0.0
    %184 = vmatprep.subr.mxu0 0.0
    %185 = vmatpush2.msra.mxu0 0.0
    %186 = vmatprep.subr.mxu0 0.0
    %187 = vmatpush2.msra.mxu0 0.0
    %188 = vmatprep.subr.mxu0 0.0
    %189 = vmatpush2.msra.mxu0 0.0
    %190 = vmatprep.subr.mxu0 0.0
    %191 = vmatpush2.msra.mxu0 0.0
    %192 = vmatprep.subr.mxu0 0.0
    %193 = vmatpush2.msra.mxu0 0.0
    %194 = vmatprep.subr.mxu0 0.0
    %195 = vmatpush2.msra.mxu0 0.0
    %196 = vmatprep.mubr.f32.mxu0 0.0
    %197 = vmatmul.mubr.f32.gmra.mxu0 %v111
    %v198 = vpop.f32.mrf.mxu0
    %v199 = vadd.f32 %v82, %v198
    %v200 = vpop.f32.mrf.mxu0
    %v201 = vadd.f32 %v86, %v200
    %202 = vdwg.mxu0
    %203 = vmatprep.subr.mxu0 0.0
    %204 = vmatpush1.msra.mxu0 0.0
    %205 = vmatprep.subr.mxu0 0.0
    %206 = vmatpush1.msra.mxu0 0.0
    %207 = vmatprep.subr.mxu0 0.0
    %208 = vmatpush1.msra.mxu0 0.0
    %209 = vmatprep.subr.mxu0 0.0
    %210 = vmatpush1.msra.mxu0 0.0
    %211 = vmatprep.subr.mxu0 0.0
    %212 = vmatpush1.msra.mxu0 0.0
    %213 = vmatprep.subr.mxu0 0.0
    %214 = vmatpush1.msra.mxu0 0.0
    %215 = vmatprep.subr.mxu0 0.0
    %216 = vmatpush1.msra.mxu0 0.0
    %217 = vmatprep.subr.mxu0 0.0
    %218 = vmatpush1.msra.mxu0 0.0
    %219 = vmatprep.subr.mxu0 0.0
    %220 = vmatpush1.msra.mxu0 0.0
    %221 = vmatprep.subr.mxu0 0.0
    %222 = vmatpush1.msra.mxu0 0.0
    %223 = vmatprep.subr.mxu0 0.0
    %224 = vmatpush1.msra.mxu0 0.0
    %225 = vmatprep.subr.mxu0 0.0
    %226 = vmatpush1.msra.mxu0 0.0
    %227 = vmatprep.subr.mxu0 %v124
    %228 = vmatpush1.msra.mxu0 %v121
    %229 = vmatprep.subr.mxu0 %v68
    %230 = vmatpush1.msra.mxu0 %v67
    %231 = vmatprep.subr.mxu0 %v62
    %232 = vmatpush1.msra.mxu0 %v61
    %233 = vmatprep.subr.mxu0 %v56
    %234 = vmatpush1.msra.mxu0 %v55
    %235 = vmatprep.subr.mxu0 0.0
    %236 = vmatpush2.msra.mxu0 0.0
    %237 = vmatprep.subr.mxu0 0.0
    %238 = vmatpush2.msra.mxu0 0.0
    %239 = vmatprep.subr.mxu0 0.0
    %240 = vmatpush2.msra.mxu0 0.0
    %241 = vmatprep.subr.mxu0 0.0
    %242 = vmatpush2.msra.mxu0 0.0
    %243 = vmatprep.subr.mxu0 0.0
    %244 = vmatpush2.msra.mxu0 0.0
    %245 = vmatprep.subr.mxu0 0.0
    %246 = vmatpush2.msra.mxu0 0.0
    %247 = vmatprep.subr.mxu0 0.0
    %248 = vmatpush2.msra.mxu0 0.0
    %249 = vmatprep.subr.mxu0 0.0
    %250 = vmatpush2.msra.mxu0 0.0
    %251 = vmatprep.subr.mxu0 0.0
    %252 = vmatpush2.msra.mxu0 0.0
    %253 = vmatprep.subr.mxu0 0.0
    %254 = vmatpush2.msra.mxu0 0.0
    %255 = vmatprep.subr.mxu0 0.0
    %256 = vmatpush2.msra.mxu0 0.0
    %257 = vmatprep.subr.mxu0 0.0
    %258 = vmatpush2.msra.mxu0 0.0
    %259 = vmatprep.subr.mxu0 0.0
    %260 = vmatpush2.msra.mxu0 0.0
    %261 = vmatprep.subr.mxu0 0.0
    %262 = vmatpush2.msra.mxu0 0.0
    %263 = vmatprep.subr.mxu0 0.0
    %264 = vmatpush2.msra.mxu0 0.0
    %265 = vmatprep.subr.mxu0 0.0
    %266 = vmatpush2.msra.mxu0 0.0
    %267 = vmatprep.mubr.f32.mxu0 0.0
    %268 = vmatmul.mubr.f32.gmra.mxu0 %v111
    %v269 = vpop.f32.mrf.mxu0
    %v270 = vadd.f32 %v90, %v269
    %v271 = vpop.f32.mrf.mxu0
    %v272 = vadd.f32 %v94, %v271
    %273 = vdwg.mxu0
    %274 = vmatprep.subr.mxu0 0.0
    %275 = vmatpush1.msra.mxu0 0.0
    %276 = vmatprep.subr.mxu0 0.0
    %277 = vmatpush1.msra.mxu0 0.0
    %278 = vmatprep.subr.mxu0 0.0
    %279 = vmatpush1.msra.mxu0 0.0
    %280 = vmatprep.subr.mxu0 0.0
    %281 = vmatpush1.msra.mxu0 0.0
    %282 = vmatprep.subr.mxu0 0.0
    %283 = vmatpush1.msra.mxu0 0.0
    %284 = vmatprep.subr.mxu0 0.0
    %285 = vmatpush1.msra.mxu0 0.0
    %286 = vmatprep.subr.mxu0 0.0
    %287 = vmatpush1.msra.mxu0 0.0
    %288 = vmatprep.subr.mxu0 0.0
    %289 = vmatpush1.msra.mxu0 0.0
    %290 = vmatprep.subr.mxu0 0.0
    %291 = vmatpush1.msra.mxu0 0.0
    %292 = vmatprep.subr.mxu0 0.0
    %293 = vmatpush1.msra.mxu0 0.0
    %294 = vmatprep.subr.mxu0 0.0
    %295 = vmatpush1.msra.mxu0 0.0
    %296 = vmatprep.subr.mxu0 0.0
    %297 = vmatpush1.msra.mxu0 0.0
    %298 = vmatprep.subr.mxu0 %v130
    %299 = vmatpush1.msra.mxu0 %v127
    %300 = vmatprep.subr.mxu0 %v70
    %301 = vmatpush1.msra.mxu0 %v69
    %302 = vmatprep.subr.mxu0 %v64
    %303 = vmatpush1.msra.mxu0 %v63
    %304 = vmatprep.subr.mxu0 %v58
    %305 = vmatpush1.msra.mxu0 %v57
    %306 = vmatprep.subr.mxu0 0.0
    %307 = vmatpush2.msra.mxu0 0.0
    %308 = vmatprep.subr.mxu0 0.0
    %309 = vmatpush2.msra.mxu0 0.0
    %310 = vmatprep.subr.mxu0 0.0
    %311 = vmatpush2.msra.mxu0 0.0
    %312 = vmatprep.subr.mxu0 0.0
    %313 = vmatpush2.msra.mxu0 0.0
    %314 = vmatprep.subr.mxu0 0.0
    %315 = vmatpush2.msra.mxu0 0.0
    %316 = vmatprep.subr.mxu0 0.0
    %317 = vmatpush2.msra.mxu0 0.0
    %318 = vmatprep.subr.mxu0 0.0
    %319 = vmatpush2.msra.mxu0 0.0
    %320 = vmatprep.subr.mxu0 0.0
    %321 = vmatpush2.msra.mxu0 0.0
    %322 = vmatprep.subr.mxu0 0.0
    %323 = vmatpush2.msra.mxu0 0.0
    %324 = vmatprep.subr.mxu0 0.0
    %325 = vmatpush2.msra.mxu0 0.0
    %326 = vmatprep.subr.mxu0 0.0
    %327 = vmatpush2.msra.mxu0 0.0
    %328 = vmatprep.subr.mxu0 0.0
    %329 = vmatpush2.msra.mxu0 0.0
    %330 = vmatprep.subr.mxu0 0.0
    %331 = vmatpush2.msra.mxu0 0.0
    %332 = vmatprep.subr.mxu0 0.0
    %333 = vmatpush2.msra.mxu0 0.0
    %334 = vmatprep.subr.mxu0 0.0
    %335 = vmatpush2.msra.mxu0 0.0
    %336 = vmatprep.subr.mxu0 0.0
    %337 = vmatpush2.msra.mxu0 0.0
    %338 = vmatprep.mubr.f32.mxu0 0.0
    %339 = vmatmul.mubr.f32.gmra.mxu0 %v111
    %v340 = vpop.f32.mrf.mxu0
    %v341 = vadd.f32 %v98, %v340
    %v342 = vpop.f32.mrf.mxu0
    %v343 = vadd.f32 %v102, %v342
    %344 = vdwg.mxu0
    %v345 = vmul.f32 %v199, 0.5
    %v346 = vmul.f32 %v201, 0.5
    %v347 = vmul.f32 %v270, 0.5
    %v348 = vmul.f32 %v272, 0.5
    %v349 = vmul.f32 %v341, 0.5
    %v350 = vmul.f32 %v343, 0.5
    %v351 = vtanh.pop %v345
    %v352 = vtanh.pop %v346
    %v353 = vtanh.pop %v347
    %v354 = vtanh.pop %v348
    %v355 = vtanh.pop %v349
    %v356 = vtanh.pop %v350
    %v357 = vmul.f32 %v351, 0.5
    %v358 = vmul.f32 %v352, 0.5
    %v359 = vmul.f32 %v353, 0.5
    %v360 = vmul.f32 %v354, 0.5
    %v361 = vmul.f32 %v355, 0.5
    %v362 = vmul.f32 %v356, 0.5
    %v363 = vadd.f32 %v357, 0.5
    %v364 = vadd.f32 %v358, 0.5
    %v365 = vadd.f32 %v359, 0.5
    %v366 = vadd.f32 %v360, 0.5
    %v367 = vadd.f32 %v361, 0.5
    %v368 = vadd.f32 %v362, 0.5
    %v375 = vcombine.low %v363, %v364
    %v376 = vcombine.low %v365, %v366
    %v377 = vcombine.low %v367, %v368
    %v379 = vunpack.c.l.s4 1966171168
    %v380 = vunpack.c.0.s8 %v379
    %v381 = vlaneseq
    %v382 = vshrl.u32 %v381, 7
    %v383 = vsub.s32 %v380, %v382
    %v384 = vrot.slane %v375, %v383
    %v386 = vunpack.c.l.s4 1966171168
    %v387 = vunpack.c.0.s8 %v386
    %v388 = vlaneseq
    %v389 = vshrl.u32 %v388, 7
    %v390 = vsub.s32 %v387, %v389
    %v391 = vrot.slane %v376, %v390
    %v393 = vunpack.c.l.s4 1966171168
    %v394 = vunpack.c.0.s8 %v393
    %v395 = vlaneseq
    %v396 = vshrl.u32 %v395, 7
    %v397 = vsub.s32 %v394, %v396
    %v398 = vrot.slane %v377, %v397
    %v399 = vcombine.low %v384, %v391
    %v401 = vunpack.c.l.s4 1966171168
    %v402 = vunpack.c.0.s8 %v401
    %v403 = vlaneseq
    %v404 = vshrl.u32 %v403, 7
    %v405 = vsub.s32 %v402, %v404
    %v406 = vrot.slane %v399, %v405
    %v408 = vunpack.c.l.s4 1966171168
    %v409 = vunpack.c.0.s8 %v408
    %v410 = vlaneseq
    %v411 = vshrl.u32 %v410, 7
    %v412 = vsub.s32 %v409, %v411
    %v413 = vrot.slane %v398, %v412
    %v414 = vcombine.low %v406, %v413
    %v416 = vlaneseq
    %vm417 = vcmp.ge.s32.totalorder %v416, 0
    %vm418 = vcmp.lt.s32.totalorder %v416, 672
    %vm419 = vmand %vm417, %vm418
    %420 = vst.msk [vmem:[#allocation8] sm:$0x3f] %vm419, %v414
    // Predicated region
    $region26: #{tpu_custom_call.1} parent=1 // pred_check
      _
    $region27: #{tpu_custom_call.1} parent=1 // pred_check_branch
      %422 = sbr.rel (0) target = $region29
    $region28: #{tpu_custom_call.1} parent=1 // pred_region
      %s424 = ssub.s32 96, 96
      %425 = vsyncadd [#allocation4], %s424
      %s427 = sshll.u32 [#allocation8], 4
      %s428 = int_to_ptr.vmem [resolvable:$true] %s427
      %430 = dma.vmem_to_hbm [thread:$0]  %s428, 96, %s3, [#allocation4]
    $region29: #{tpu_custom_call.1} parent=1 // pred_fallthru
      _
    // Predicated region
    $region30: #{tpu_custom_call.1} parent=1 // pred_check
      _
    $region31: #{tpu_custom_call.1} parent=1 // pred_check_branch
      %432 = sbr.rel (0) target = $region33
    $region32: #{tpu_custom_call.1} parent=1 // pred_region
      %433 = dma.done [#allocation4], 96
    $region33: #{tpu_custom_call.1} parent=1 // pred_fallthru
      _
    %434 = vsyncpa [#allocation3], 1
    %435 = vsyncpa [#allocation6], 1
    %436 = vsyncpa [#allocation4], 1

</llo_original>
